<compile_context>
chip_gen: v6e
topology: v6e:2x2x1
jax: 0.10.0
libtpu: 0.0.40
codegen_flags: <defaults>
</compile_context>

<pallas_src>
import functools
import math

import jax
import jax.numpy as jnp
from jax import lax
from jax.experimental import pallas as pl
from jax.experimental.pallas import tpu as pltpu


def _same_channel_lane_sum(stats, *, cout, wo):
    """Sum lanes holding the same channel (lane index = wo*Cout + c) and broadcast
    the result back to every lane.  stats: (R, Wo*Cout) f32."""
    L = wo * cout
    if wo & (wo - 1) == 0:
        # log2(Wo) cyclic lane rotations (XLU slot, overlaps with VPU/MXU work).
        shift = cout
        while shift < L:
            stats = stats + pltpu.roll(stats, shift=shift, axis=1)
            shift *= 2
        return stats
    # Fallback (Wo not a power of two): 0/1 same-channel projection built in-kernel
    # (no HBM traffic), single small matmul.
    li = lax.broadcasted_iota(jnp.int32, (L, L), 0) % cout
    lj = lax.broadcasted_iota(jnp.int32, (L, L), 1) % cout
    proj = (li == lj).astype(jnp.float32)
    return jnp.dot(stats, proj, preferred_element_type=jnp.float32)


def _backbone_kernel(x_ref, t1_ref, t2_ref, b1_ref, b2_ref, g1_ref, bt1_ref,
                     g2_ref, bt2_ref, out_ref, xp1_ref, xp2_ref,
                     *, N, H, Ho, KH, pad, inv_count, cout, wo,
                     negative_slope, eps):
    L = out_ref.shape[-1]

    def conv(xp_ref, t_ref):
        # KH accumulating MXU dots over the vertical taps; each LHS chunk is a
        # lane-contiguous bf16 slab, RHS is the matching Toeplitz row-block.
        acc = None
        for kh in range(KH):
            chunk = xp_ref[:, kh:kh + Ho, :].reshape(N * Ho, -1)        # bf16
            part = jnp.dot(chunk, t_ref[kh], preferred_element_type=jnp.float32)
            acc = part if acc is None else acc + part
        return acc                                                       # (N*Ho, L) f32

    def lrelu_bn(y, gamma_lane, beta_lane):
        y = jnp.where(y > 0, y, negative_slope * y)
        # One-pass stats: per-lane sum / sum-of-squares (sublane reduce), then
        # same-channel lane reduce via rolls; 1/count folded into one multiply.
        stats = jnp.concatenate(
            [jnp.sum(y, axis=0, keepdims=True),
             jnp.sum(y * y, axis=0, keepdims=True)], axis=0)             # (2, L) f32
        stats = _same_channel_lane_sum(stats, cout=cout, wo=wo) * inv_count
        mean = stats[0:1, :]
        var = stats[1:2, :] - mean * mean          # biased variance (BatchNorm2d)
        scale = gamma_lane * lax.rsqrt(var + eps)
        shift = beta_lane - mean * scale
        return y * scale + shift

    # ----------------- stage 1: Conv2d -> LeakyReLU -> BatchNorm2d -----------------
    # H-direction zero padding in a bf16 VMEM scratch: zero ONLY the pad rows,
    # write the interior directly from the (already bf16) input slab.
    zpad1 = jnp.zeros((N, pad, xp1_ref.shape[-1]), xp1_ref.dtype)
    xp1_ref[:, :pad, :] = zpad1
    xp1_ref[:, pad + H:, :] = zpad1
    xp1_ref[:, pad:pad + H, :] = x_ref[...]

    # Conv bias is added BEFORE the LeakyReLU, so it does NOT cancel in BN -> keep it.
    y1 = lrelu_bn(conv(xp1_ref, t1_ref) + b1_ref[...], g1_ref[...], bt1_ref[...])

    # ----------------- stage 2: Conv2d -> LeakyReLU -> BatchNorm2d -----------------
    zpad2 = jnp.zeros((N, pad, L), xp2_ref.dtype)
    xp2_ref[:, :pad, :] = zpad2
    xp2_ref[:, pad + Ho:, :] = zpad2
    xp2_ref[:, pad:pad + Ho, :] = y1.reshape(N, Ho, L).astype(xp2_ref.dtype)

    out_ref[...] = lrelu_bn(conv(xp2_ref, t2_ref) + b2_ref[...],
                            g2_ref[...], bt2_ref[...])


def _toeplitz_conv_weight(w_hwio, width, pad):
    """Block-Toeplitz matrix T so that a stride-1, zero-padded conv along W is
    out_row = in_row @ T, rows packed lane-dense as (width*Cin,) / (wout*Cout,).
    Shape (KH*width*Cin, wout*Cout); the KH row-blocks are the vertical taps."""
    KH, KW, Cin, Cout = w_hwio.shape
    wout = width + 2 * pad - KW + 1
    wi = jnp.arange(width)[:, None]                    # input column
    wo = jnp.arange(wout)[None, :]                     # output column
    kw = wi - wo + pad                                 # tap index, (width, wout)
    valid = (kw >= 0) & (kw < KW)
    g = w_hwio[:, jnp.clip(kw, 0, KW - 1), :, :]       # (KH, width, wout, Cin, Cout)
    g = jnp.where(valid[None, :, :, None, None], g, 0.0)
    g = jnp.transpose(g, (0, 1, 3, 2, 4))              # (KH, width, Cin, wout, Cout)
    return g.reshape(KH * width * Cin, wout * Cout)


def make_backbone_forward(params, H, W, *, padding=1, negative_slope=0.01,
                          eps=1e-5):
    """Builds a jittable forward for (Conv2d -> LeakyReLU -> BatchNorm2d) x 2.

    Toeplitz conv weights and per-lane BN/bias constants are built ONCE here
    (hoisted out of the per-forward path); the returned fn is NCHW in / NCHW out.
    """
    w1, w2 = params["w1"], params["w2"]
    KH, KW, Cin, Cout = w1.shape
    Ho, Wo = H + 2 * padding - KH + 1, W + 2 * padding - KW + 1
    # stage 2 keeps the spatial dims (true for the module defaults k=3, s=1, p=1)
    assert Ho + 2 * padding - KH + 1 == Ho and Wo + 2 * padding - KW + 1 == Wo
    L = Wo * Cout

    # ---- hoisted constant prep (runs once, reused across forwards) ----
    t1 = (_toeplitz_conv_weight(w1, W, padding)
          .reshape(KH, W * Cin, L).astype(jnp.bfloat16))       # KH row-blocks, K=W*Cin
    t2 = (_toeplitz_conv_weight(w2, Wo, padding)
          .reshape(KH, Wo * Cout, L).astype(jnp.bfloat16))     # KH row-blocks, K=Wo*Cout

    def lane(v):                                    # per-channel (Cout,) -> (1, L)
        return jnp.tile(v.astype(jnp.float32), Wo)[None, :]

    consts = (t1, t2, lane(params["b1"]), lane(params["b2"]),
              lane(params["g1"]), lane(params["beta1"]),
              lane(params["g2"]), lane(params["beta2"]))

    def forward(x_nchw):
        N = x_nchw.shape[0]
        assert x_nchw.shape == (N, Cin, H, W), x_nchw.shape
        # lane-dense bf16 input slab (N, H, W*Cin) — halves input DMA bytes
        x_slab = (jnp.transpose(x_nchw, (0, 2, 3, 1))
                  .reshape(N, H, W * Cin).astype(jnp.bfloat16))

        kernel = functools.partial(
            _backbone_kernel, N=N, H=H, Ho=Ho, KH=KH, pad=padding,
            inv_count=1.0 / (N * Ho * Wo), cout=Cout, wo=Wo,
            negative_slope=negative_slope, eps=eps)

        vmem = pl.BlockSpec(memory_space=pltpu.MemorySpace.VMEM)
        out2d = pl.pallas_call(
            kernel,
            out_shape=jax.ShapeDtypeStruct((N * Ho, L), jnp.float32),
            in_specs=[vmem] * 9,
            out_specs=vmem,
            scratch_shapes=[
                pltpu.VMEM((N, H + 2 * padding, W * Cin), jnp.bfloat16),  # padded stage-1 input
                pltpu.VMEM((N, Ho + 2 * padding, L), jnp.bfloat16),       # padded stage-1 output
            ],
        )(x_slab, *consts)

        return jnp.transpose(out2d.reshape(N, Ho, Wo, Cout), (0, 3, 1, 2))

    return forward


# -------------------- pure-JAX f32 reference (correctness check) --------------------
def _ref_stage(x, w, b, g, beta, padding, slope, eps=1e-5):
    y = lax.conv_general_dilated(
        x, w, window_strides=(1, 1),
        padding=[(padding, padding), (padding, padding)],
        dimension_numbers=("NHWC", "HWIO", "NHWC"))
    y = y + b[None, None, None, :]
    y = jnp.where(y > 0, y, slope * y)
    mean = jnp.mean(y, axis=(0, 1, 2), keepdims=True)
    var = jnp.mean((y - mean) ** 2, axis=(0, 1, 2), keepdims=True)
    y = (y - mean) / jnp.sqrt(var + eps)
    return y * g[None, None, None, :] + beta[None, None, None, :]


if __name__ == "__main__":
    # Shapes consistent with the module: batch=2, in_ch=4, out_ch=8, 16x16 spatial,
    # 3x3 kernel, stride=1, padding=1.
    N, Cin, H, W = 2, 4, 16, 16
    Cout, KH, KW = 8, 3, 3

    key = jax.random.PRNGKey(0)
    ks = jax.random.split(key, 9)
    bound1 = 1.0 / math.sqrt(Cin * KH * KW)
    bound2 = 1.0 / math.sqrt(Cout * KH * KW)
    params = dict(
        w1=jax.random.uniform(ks[0], (KH, KW, Cin, Cout), jnp.float32, -bound1, bound1),
        b1=jax.random.uniform(ks[1], (Cout,), jnp.float32, -bound1, bound1),
        g1=jax.random.uniform(ks[2], (Cout,), jnp.float32, 0.5, 1.5),
        beta1=jax.random.uniform(ks[3], (Cout,), jnp.float32, -0.1, 0.1),
        w2=jax.random.uniform(ks[4], (KH, KW, Cout, Cout), jnp.float32, -bound2, bound2),
        b2=jax.random.uniform(ks[5], (Cout,), jnp.float32, -bound2, bound2),
        g2=jax.random.uniform(ks[6], (Cout,), jnp.float32, 0.5, 1.5),
        beta2=jax.random.uniform(ks[7], (Cout,), jnp.float32, -0.1, 0.1),
    )
    x = jax.random.normal(ks[8], (N, Cin, H, W), jnp.float32)   # NCHW input

    fwd = jax.jit(make_backbone_forward(params, H, W))          # constants hoisted
    out = jax.block_until_ready(fwd(x))

    # reference (f32)
    xr = jnp.transpose(x, (0, 2, 3, 1))
    xr = _ref_stage(xr, params["w1"], params["b1"], params["g1"], params["beta1"], 1, 0.01)
    xr = _ref_stage(xr, params["w2"], params["b2"], params["g2"], params["beta2"], 1, 0.01)
    ref = jnp.transpose(xr, (0, 3, 1, 2))

    assert out.shape == (N, Cout, H, W), out.shape
    err = float(jnp.max(jnp.abs(out - ref)))
    # bf16 MXU inputs / bf16 inter-stage activation (f32 accumulation & BN stats)
    # -> loosened tolerance vs the f32 reference
    assert jnp.allclose(out, ref, atol=5e-2, rtol=5e-2), err
    print("KERNEL_OK")
</pallas_src>

<mosaic_0001>
module attributes {stable_mosaic.version = 11 : i64} {
  func.func @_backbone_kernel(%arg0: memref<2x16x64xbf16, #tpu.memory_space<vmem>>, %arg1: memref<3x64x128xbf16, #tpu.memory_space<vmem>>, %arg2: memref<3x128x128xbf16, #tpu.memory_space<vmem>>, %arg3: memref<1x128xf32, #tpu.memory_space<vmem>>, %arg4: memref<1x128xf32, #tpu.memory_space<vmem>>, %arg5: memref<1x128xf32, #tpu.memory_space<vmem>>, %arg6: memref<1x128xf32, #tpu.memory_space<vmem>>, %arg7: memref<1x128xf32, #tpu.memory_space<vmem>>, %arg8: memref<1x128xf32, #tpu.memory_space<vmem>>, %arg9: memref<32x128xf32, #tpu.memory_space<vmem>>, %arg10: memref<2x18x64xbf16, #tpu.memory_space<vmem>>, %arg11: memref<2x18x128xbf16, #tpu.memory_space<vmem>>) attributes {dimension_semantics = [], scalar_prefetch = 0 : i64, scratch_operands = 2 : i64, tpu.core_type = #tpu.core_type<tc>} {
    %cst = arith.constant 0.000000e+00 : bf16
    %0 = vector.broadcast %cst : bf16 to vector<2x1x64xbf16>
    %c0 = arith.constant 0 : index
    %c0_0 = arith.constant 0 : index
    %c0_1 = arith.constant 0 : index
    %1 = vector.load %arg10[%c0, %c0_0, %c0_1] : memref<2x18x64xbf16, #tpu.memory_space<vmem>>, vector<2x1x64xbf16>
    tpu.vector_store %arg10[%c0, %c0_0, %c0_1], %0 {strides = array<i32>} : memref<2x18x64xbf16, #tpu.memory_space<vmem>>, vector<2x1x64xbf16>,
    %c0_2 = arith.constant 0 : index
    %c17 = arith.constant 17 : index
    %c0_3 = arith.constant 0 : index
    %2 = vector.load %arg10[%c0_2, %c17, %c0_3] : memref<2x18x64xbf16, #tpu.memory_space<vmem>>, vector<2x1x64xbf16>
    tpu.vector_store %arg10[%c0_2, %c17, %c0_3], %0 {strides = array<i32>} : memref<2x18x64xbf16, #tpu.memory_space<vmem>>, vector<2x1x64xbf16>,
    %c0_4 = arith.constant 0 : index
    %c0_5 = arith.constant 0 : index
    %c0_6 = arith.constant 0 : index
    %3 = vector.load %arg0[%c0_4, %c0_5, %c0_6] : memref<2x16x64xbf16, #tpu.memory_space<vmem>>, vector<2x16x64xbf16>
    %c0_7 = arith.constant 0 : index
    %c1 = arith.constant 1 : index
    %c0_8 = arith.constant 0 : index
    %4 = vector.load %arg10[%c0_7, %c1, %c0_8] : memref<2x18x64xbf16, #tpu.memory_space<vmem>>, vector<2x16x64xbf16>
    tpu.vector_store %arg10[%c0_7, %c1, %c0_8], %3 {strides = array<i32>} : memref<2x18x64xbf16, #tpu.memory_space<vmem>>, vector<2x16x64xbf16>,
    %c0_9 = arith.constant 0 : index
    %c0_10 = arith.constant 0 : index
    %c0_11 = arith.constant 0 : index
    %5 = vector.load %arg10[%c0_9, %c0_10, %c0_11] : memref<2x18x64xbf16, #tpu.memory_space<vmem>>, vector<2x16x64xbf16>
    %6 = vector.shape_cast %5 : vector<2x16x64xbf16> to vector<32x64xbf16>
    %c0_12 = arith.constant 0 : index
    %c0_13 = arith.constant 0 : index
    %c0_14 = arith.constant 0 : index
    %7 = vector.load %arg1[%c0_12, %c0_13, %c0_14] : memref<3x64x128xbf16, #tpu.memory_space<vmem>>, vector<1x64x128xbf16>
    %8 = vector.shape_cast %7 : vector<1x64x128xbf16> to vector<64x128xbf16>
    %cst_15 = arith.constant dense<0.000000e+00> : vector<32x128xf32>
    %9 = tpu.matmul %6, %8, %cst_15 {dimension_numbers = #tpu.dot_dimension_numbers<[1], [0], [0], [1], [0, 0, 1, 1], [], []>} : vector<32x64xbf16>, vector<64x128xbf16>, vector<32x128xf32> -> vector<32x128xf32>
    %c0_16 = arith.constant 0 : index
    %c1_17 = arith.constant 1 : index
    %c0_18 = arith.constant 0 : index
    %10 = vector.load %arg10[%c0_16, %c1_17, %c0_18] : memref<2x18x64xbf16, #tpu.memory_space<vmem>>, vector<2x16x64xbf16>
    %11 = vector.shape_cast %10 : vector<2x16x64xbf16> to vector<32x64xbf16>
    %c1_19 = arith.constant 1 : index
    %c0_20 = arith.constant 0 : index
    %c0_21 = arith.constant 0 : index
    %12 = vector.load %arg1[%c1_19, %c0_20, %c0_21] : memref<3x64x128xbf16, #tpu.memory_space<vmem>>, vector<1x64x128xbf16>
    %13 = vector.shape_cast %12 : vector<1x64x128xbf16> to vector<64x128xbf16>
    %cst_22 = arith.constant dense<0.000000e+00> : vector<32x128xf32>
    %14 = tpu.matmul %11, %13, %cst_22 {dimension_numbers = #tpu.dot_dimension_numbers<[1], [0], [0], [1], [0, 0, 1, 1], [], []>} : vector<32x64xbf16>, vector<64x128xbf16>, vector<32x128xf32> -> vector<32x128xf32>
    %15 = arith.addf %9, %14 : vector<32x128xf32>
    %c0_23 = arith.constant 0 : index
    %c2 = arith.constant 2 : index
    %c0_24 = arith.constant 0 : index
    %16 = vector.load %arg10[%c0_23, %c2, %c0_24] : memref<2x18x64xbf16, #tpu.memory_space<vmem>>, vector<2x16x64xbf16>
    %17 = vector.shape_cast %16 : vector<2x16x64xbf16> to vector<32x64xbf16>
    %c2_25 = arith.constant 2 : index
    %c0_26 = arith.constant 0 : index
    %c0_27 = arith.constant 0 : index
    %18 = vector.load %arg1[%c2_25, %c0_26, %c0_27] : memref<3x64x128xbf16, #tpu.memory_space<vmem>>, vector<1x64x128xbf16>
    %19 = vector.shape_cast %18 : vector<1x64x128xbf16> to vector<64x128xbf16>
    %cst_28 = arith.constant dense<0.000000e+00> : vector<32x128xf32>
    %20 = tpu.matmul %17, %19, %cst_28 {dimension_numbers = #tpu.dot_dimension_numbers<[1], [0], [0], [1], [0, 0, 1, 1], [], []>} : vector<32x64xbf16>, vector<64x128xbf16>, vector<32x128xf32> -> vector<32x128xf32>
    %21 = arith.addf %15, %20 : vector<32x128xf32>
    %c0_29 = arith.constant 0 : index
    %c0_30 = arith.constant 0 : index
    %22 = vector.load %arg3[%c0_29, %c0_30] : memref<1x128xf32, #tpu.memory_space<vmem>>, vector<1x128xf32>
    %23 = vector.broadcast %22 : vector<1x128xf32> to vector<32x128xf32>
    %24 = arith.addf %21, %23 : vector<32x128xf32>
    %c0_31 = arith.constant 0 : index
    %c0_32 = arith.constant 0 : index
    %25 = vector.load %arg5[%c0_31, %c0_32] : memref<1x128xf32, #tpu.memory_space<vmem>>, vector<1x128xf32>
    %c0_33 = arith.constant 0 : index
    %c0_34 = arith.constant 0 : index
    %26 = vector.load %arg6[%c0_33, %c0_34] : memref<1x128xf32, #tpu.memory_space<vmem>>, vector<1x128xf32>
    %cst_35 = arith.constant 0.000000e+00 : f32
    %27 = vector.broadcast %cst_35 : f32 to vector<32x128xf32>
    %28 = arith.cmpf ogt, %24, %27 : vector<32x128xf32>
    %cst_36 = arith.constant 0.00999999977 : f32
    %29 = vector.broadcast %cst_36 : f32 to vector<32x128xf32>
    %30 = arith.mulf %29, %24 : vector<32x128xf32>
    %31 = arith.select %28, %24, %30 : vector<32x128xi1>, vector<32x128xf32>
    %cst_37 = arith.constant dense<0.000000e+00> : vector<128xf32>
    %32 = vector.multi_reduction <add>, %31, %cst_37 [0] : vector<32x128xf32> to vector<128xf32>
    %33 = vector.shape_cast %32 : vector<128xf32> to vector<1x128xf32>
    %34 = arith.mulf %31, %31 : vector<32x128xf32>
    %cst_38 = arith.constant dense<0.000000e+00> : vector<128xf32>
    %35 = vector.multi_reduction <add>, %34, %cst_38 [0] : vector<32x128xf32> to vector<128xf32>
    %36 = vector.shape_cast %35 : vector<128xf32> to vector<1x128xf32>
    %37 = tpu.concatenate %33, %36 in 0 : vector<1x128xf32>, vector<1x128xf32> -> vector<2x128xf32>
    %c8_i32 = arith.constant 8 : i32
    %38 = tpu.dynamic_rotate %37 by %c8_i32 dim 1 : vector<2x128xf32>, i32 -> vector<2x128xf32>
    %39 = arith.addf %37, %38 : vector<2x128xf32>
    %c16_i32 = arith.constant 16 : i32
    %40 = tpu.dynamic_rotate %39 by %c16_i32 dim 1 : vector<2x128xf32>, i32 -> vector<2x128xf32>
    %41 = arith.addf %39, %40 : vector<2x128xf32>
    %c32_i32 = arith.constant 32 : i32
    %42 = tpu.dynamic_rotate %41 by %c32_i32 dim 1 : vector<2x128xf32>, i32 -> vector<2x128xf32>
    %43 = arith.addf %41, %42 : vector<2x128xf32>
    %c64_i32 = arith.constant 64 : i32
    %44 = tpu.dynamic_rotate %43 by %c64_i32 dim 1 : vector<2x128xf32>, i32 -> vector<2x128xf32>
    %45 = arith.addf %43, %44 : vector<2x128xf32>
    %cst_39 = arith.constant 0.001953125 : f32
    %46 = vector.broadcast %cst_39 : f32 to vector<2x128xf32>
    %47 = arith.mulf %45, %46 : vector<2x128xf32>
    %48 = vector.extract_strided_slice %47 {offsets = [0, 0], sizes = [1, 128], strides = [1, 1]} : vector<2x128xf32> to vector<1x128xf32>
    %49 = vector.extract_strided_slice %47 {offsets = [1, 0], sizes = [1, 128], strides = [1, 1]} : vector<2x128xf32> to vector<1x128xf32>
    %50 = arith.mulf %48, %48 : vector<1x128xf32>
    %51 = arith.subf %49, %50 : vector<1x128xf32>
    %cst_40 = arith.constant 9.99999974E-6 : f32
    %52 = vector.broadcast %cst_40 : f32 to vector<1x128xf32>
    %53 = arith.addf %51, %52 : vector<1x128xf32>
    %54 = math.rsqrt %53 : vector<1x128xf32>
    %55 = arith.mulf %25, %54 : vector<1x128xf32>
    %56 = arith.mulf %48, %55 : vector<1x128xf32>
    %57 = arith.subf %26, %56 : vector<1x128xf32>
    %58 = vector.broadcast %55 : vector<1x128xf32> to vector<32x128xf32>
    %59 = arith.mulf %31, %58 : vector<32x128xf32>
    %60 = vector.broadcast %57 : vector<1x128xf32> to vector<32x128xf32>
    %61 = arith.addf %59, %60 : vector<32x128xf32>
    %cst_41 = arith.constant 0.000000e+00 : bf16
    %62 = vector.broadcast %cst_41 : bf16 to vector<2x1x128xbf16>
    %c0_42 = arith.constant 0 : index
    %c0_43 = arith.constant 0 : index
    %c0_44 = arith.constant 0 : index
    %63 = vector.load %arg11[%c0_42, %c0_43, %c0_44] : memref<2x18x128xbf16, #tpu.memory_space<vmem>>, vector<2x1x128xbf16>
    tpu.vector_store %arg11[%c0_42, %c0_43, %c0_44], %62 {strides = array<i32>} : memref<2x18x128xbf16, #tpu.memory_space<vmem>>, vector<2x1x128xbf16>,
    %c0_45 = arith.constant 0 : index
    %c17_46 = arith.constant 17 : index
    %c0_47 = arith.constant 0 : index
    %64 = vector.load %arg11[%c0_45, %c17_46, %c0_47] : memref<2x18x128xbf16, #tpu.memory_space<vmem>>, vector<2x1x128xbf16>
    tpu.vector_store %arg11[%c0_45, %c17_46, %c0_47], %62 {strides = array<i32>} : memref<2x18x128xbf16, #tpu.memory_space<vmem>>, vector<2x1x128xbf16>,
    %65 = vector.shape_cast %61 : vector<32x128xf32> to vector<2x16x128xf32>
    %66 = arith.truncf %65 : vector<2x16x128xf32> to vector<2x16x128xbf16>
    %c0_48 = arith.constant 0 : index
    %c1_49 = arith.constant 1 : index
    %c0_50 = arith.constant 0 : index
    %67 = vector.load %arg11[%c0_48, %c1_49, %c0_50] : memref<2x18x128xbf16, #tpu.memory_space<vmem>>, vector<2x16x128xbf16>
    tpu.vector_store %arg11[%c0_48, %c1_49, %c0_50], %66 {strides = array<i32>} : memref<2x18x128xbf16, #tpu.memory_space<vmem>>, vector<2x16x128xbf16>,
    %c0_51 = arith.constant 0 : index
    %c0_52 = arith.constant 0 : index
    %c0_53 = arith.constant 0 : index
    %68 = vector.load %arg11[%c0_51, %c0_52, %c0_53] : memref<2x18x128xbf16, #tpu.memory_space<vmem>>, vector<2x16x128xbf16>
    %69 = vector.shape_cast %68 : vector<2x16x128xbf16> to vector<32x128xbf16>
    %c0_54 = arith.constant 0 : index
    %c0_55 = arith.constant 0 : index
    %c0_56 = arith.constant 0 : index
    %70 = vector.load %arg2[%c0_54, %c0_55, %c0_56] : memref<3x128x128xbf16, #tpu.memory_space<vmem>>, vector<1x128x128xbf16>
    %71 = vector.shape_cast %70 : vector<1x128x128xbf16> to vector<128x128xbf16>
    %cst_57 = arith.constant dense<0.000000e+00> : vector<32x128xf32>
    %72 = tpu.matmul %69, %71, %cst_57 {dimension_numbers = #tpu.dot_dimension_numbers<[1], [0], [0], [1], [0, 0, 1, 1], [], []>} : vector<32x128xbf16>, vector<128x128xbf16>, vector<32x128xf32> -> vector<32x128xf32>
    %c0_58 = arith.constant 0 : index
    %c1_59 = arith.constant 1 : index
    %c0_60 = arith.constant 0 : index
    %73 = vector.load %arg11[%c0_58, %c1_59, %c0_60] : memref<2x18x128xbf16, #tpu.memory_space<vmem>>, vector<2x16x128xbf16>
    %74 = vector.shape_cast %73 : vector<2x16x128xbf16> to vector<32x128xbf16>
    %c1_61 = arith.constant 1 : index
    %c0_62 = arith.constant 0 : index
    %c0_63 = arith.constant 0 : index
    %75 = vector.load %arg2[%c1_61, %c0_62, %c0_63] : memref<3x128x128xbf16, #tpu.memory_space<vmem>>, vector<1x128x128xbf16>
    %76 = vector.shape_cast %75 : vector<1x128x128xbf16> to vector<128x128xbf16>
    %cst_64 = arith.constant dense<0.000000e+00> : vector<32x128xf32>
    %77 = tpu.matmul %74, %76, %cst_64 {dimension_numbers = #tpu.dot_dimension_numbers<[1], [0], [0], [1], [0, 0, 1, 1], [], []>} : vector<32x128xbf16>, vector<128x128xbf16>, vector<32x128xf32> -> vector<32x128xf32>
    %78 = arith.addf %72, %77 : vector<32x128xf32>
    %c0_65 = arith.constant 0 : index
    %c2_66 = arith.constant 2 : index
    %c0_67 = arith.constant 0 : index
    %79 = vector.load %arg11[%c0_65, %c2_66, %c0_67] : memref<2x18x128xbf16, #tpu.memory_space<vmem>>, vector<2x16x128xbf16>
    %80 = vector.shape_cast %79 : vector<2x16x128xbf16> to vector<32x128xbf16>
    %c2_68 = arith.constant 2 : index
    %c0_69 = arith.constant 0 : index
    %c0_70 = arith.constant 0 : index
    %81 = vector.load %arg2[%c2_68, %c0_69, %c0_70] : memref<3x128x128xbf16, #tpu.memory_space<vmem>>, vector<1x128x128xbf16>
    %82 = vector.shape_cast %81 : vector<1x128x128xbf16> to vector<128x128xbf16>
    %cst_71 = arith.constant dense<0.000000e+00> : vector<32x128xf32>
    %83 = tpu.matmul %80, %82, %cst_71 {dimension_numbers = #tpu.dot_dimension_numbers<[1], [0], [0], [1], [0, 0, 1, 1], [], []>} : vector<32x128xbf16>, vector<128x128xbf16>, vector<32x128xf32> -> vector<32x128xf32>
    %84 = arith.addf %78, %83 : vector<32x128xf32>
    %c0_72 = arith.constant 0 : index
    %c0_73 = arith.constant 0 : index
    %85 = vector.load %arg4[%c0_72, %c0_73] : memref<1x128xf32, #tpu.memory_space<vmem>>, vector<1x128xf32>
    %86 = vector.broadcast %85 : vector<1x128xf32> to vector<32x128xf32>
    %87 = arith.addf %84, %86 : vector<32x128xf32>
    %c0_74 = arith.constant 0 : index
    %c0_75 = arith.constant 0 : index
    %88 = vector.load %arg7[%c0_74, %c0_75] : memref<1x128xf32, #tpu.memory_space<vmem>>, vector<1x128xf32>
    %c0_76 = arith.constant 0 : index
    %c0_77 = arith.constant 0 : index
    %89 = vector.load %arg8[%c0_76, %c0_77] : memref<1x128xf32, #tpu.memory_space<vmem>>, vector<1x128xf32>
    %cst_78 = arith.constant 0.000000e+00 : f32
    %90 = vector.broadcast %cst_78 : f32 to vector<32x128xf32>
    %91 = arith.cmpf ogt, %87, %90 : vector<32x128xf32>
    %cst_79 = arith.constant 0.00999999977 : f32
    %92 = vector.broadcast %cst_79 : f32 to vector<32x128xf32>
    %93 = arith.mulf %92, %87 : vector<32x128xf32>
    %94 = arith.select %91, %87, %93 : vector<32x128xi1>, vector<32x128xf32>
    %cst_80 = arith.constant dense<0.000000e+00> : vector<128xf32>
    %95 = vector.multi_reduction <add>, %94, %cst_80 [0] : vector<32x128xf32> to vector<128xf32>
    %96 = vector.shape_cast %95 : vector<128xf32> to vector<1x128xf32>
    %97 = arith.mulf %94, %94 : vector<32x128xf32>
    %cst_81 = arith.constant dense<0.000000e+00> : vector<128xf32>
    %98 = vector.multi_reduction <add>, %97, %cst_81 [0] : vector<32x128xf32> to vector<128xf32>
    %99 = vector.shape_cast %98 : vector<128xf32> to vector<1x128xf32>
    %100 = tpu.concatenate %96, %99 in 0 : vector<1x128xf32>, vector<1x128xf32> -> vector<2x128xf32>
    %c8_i32_82 = arith.constant 8 : i32
    %101 = tpu.dynamic_rotate %100 by %c8_i32_82 dim 1 : vector<2x128xf32>, i32 -> vector<2x128xf32>
    %102 = arith.addf %100, %101 : vector<2x128xf32>
    %c16_i32_83 = arith.constant 16 : i32
    %103 = tpu.dynamic_rotate %102 by %c16_i32_83 dim 1 : vector<2x128xf32>, i32 -> vector<2x128xf32>
    %104 = arith.addf %102, %103 : vector<2x128xf32>
    %c32_i32_84 = arith.constant 32 : i32
    %105 = tpu.dynamic_rotate %104 by %c32_i32_84 dim 1 : vector<2x128xf32>, i32 -> vector<2x128xf32>
    %106 = arith.addf %104, %105 : vector<2x128xf32>
    %c64_i32_85 = arith.constant 64 : i32
    %107 = tpu.dynamic_rotate %106 by %c64_i32_85 dim 1 : vector<2x128xf32>, i32 -> vector<2x128xf32>
    %108 = arith.addf %106, %107 : vector<2x128xf32>
    %cst_86 = arith.constant 0.001953125 : f32
    %109 = vector.broadcast %cst_86 : f32 to vector<2x128xf32>
    %110 = arith.mulf %108, %109 : vector<2x128xf32>
    %111 = vector.extract_strided_slice %110 {offsets = [0, 0], sizes = [1, 128], strides = [1, 1]} : vector<2x128xf32> to vector<1x128xf32>
    %112 = vector.extract_strided_slice %110 {offsets = [1, 0], sizes = [1, 128], strides = [1, 1]} : vector<2x128xf32> to vector<1x128xf32>
    %113 = arith.mulf %111, %111 : vector<1x128xf32>
    %114 = arith.subf %112, %113 : vector<1x128xf32>
    %cst_87 = arith.constant 9.99999974E-6 : f32
    %115 = vector.broadcast %cst_87 : f32 to vector<1x128xf32>
    %116 = arith.addf %114, %115 : vector<1x128xf32>
    %117 = math.rsqrt %116 : vector<1x128xf32>
    %118 = arith.mulf %88, %117 : vector<1x128xf32>
    %119 = arith.mulf %111, %118 : vector<1x128xf32>
    %120 = arith.subf %89, %119 : vector<1x128xf32>
    %121 = vector.broadcast %118 : vector<1x128xf32> to vector<32x128xf32>
    %122 = arith.mulf %94, %121 : vector<32x128xf32>
    %123 = vector.broadcast %120 : vector<1x128xf32> to vector<32x128xf32>
    %124 = arith.addf %122, %123 : vector<32x128xf32>
    %c0_88 = arith.constant 0 : index
    %c0_89 = arith.constant 0 : index
    %125 = vector.load %arg9[%c0_88, %c0_89] : memref<32x128xf32, #tpu.memory_space<vmem>>, vector<32x128xf32>
    tpu.vector_store %arg9[%c0_88, %c0_89], %124 {strides = array<i32>} : memref<32x128xf32, #tpu.memory_space<vmem>>, vector<32x128xf32>,
    return
  }
}

</mosaic_0001>

<llo_original>
// kernel: forward.1
$region0: #{forward.1}
  #allocation0 [shape = 'u32[]', space=smem, size = 0x4, offset = 0x4, fixed_abs, tag = 'smem constant byte address 0x4 - core index']
  #allocation1 [shape = 'u32[144,128]{1,0:T(1,128)}', space=vmem, size = 0x12000, scoped, tag = 'internal scratch']
  #allocation2 [shape = 'bf16[2,18,64]{2,1,0:T(8,128)(2,1)}', space=vmem, size = 0x3000, scoped, tag = 'scratch operand']
  #allocation3 [shape = 'bf16[2,18,128]{2,1,0:T(8,128)(2,1)}', space=vmem, size = 0x3000, scoped, tag = 'scratch operand']
  %s0 = inlined_call_operand.vmem [shape: bf16[2,16,64], index: 0, kind: input, shape index: {}]
  %s1 = inlined_call_operand.vmem [shape: bf16[3,64,128], index: 1, kind: input, shape index: {}]
  %s2 = inlined_call_operand.vmem [shape: bf16[3,128,128], index: 2, kind: input, shape index: {}]
  %s3 = inlined_call_operand.vmem [shape: f32[1,128], index: 3, kind: input, shape index: {}]
  %s4 = inlined_call_operand.vmem [shape: f32[1,128], index: 4, kind: input, shape index: {}]
  %s5 = inlined_call_operand.vmem [shape: f32[1,128], index: 5, kind: input, shape index: {}]
  %s6 = inlined_call_operand.vmem [shape: f32[1,128], index: 6, kind: input, shape index: {}]
  %s7 = inlined_call_operand.vmem [shape: f32[1,128], index: 7, kind: input, shape index: {}]
  %s8 = inlined_call_operand.vmem [shape: f32[1,128], index: 8, kind: input, shape index: {}]
  %s9 = inlined_call_operand.vmem [shape: f32[32,128], index: 9, kind: output, shape index: {}]
  %s10 = sld [smem:[#allocation0]]
  $region46: #{forward.1} parent=0
    _
  %s12 = ssub.s32 1, %s10
  %s13 = scalar_select 0, %s12, %s10
  // Predicated region
  $region2: #{forward.1} parent=0 // pred_check
    _
  $region3: #{forward.1} parent=0 // pred_check_branch
    %15 = sbr.rel (0) target = $region5
  $region4: #{forward.1} parent=0 // pred_region
    _
  $region5: #{forward.1} parent=0 // pred_fallthru
    _
  // Predicated region
  $region6: #{forward.1} parent=0 // pred_check
    _
  $region7: #{forward.1} parent=0 // pred_check_branch
    %17 = sbr.rel (0) target = $region9
  $region8: #{forward.1} parent=0 // pred_region
    _
  $region9: #{forward.1} parent=0 // pred_fallthru
    _
  // Predicated region
  $region10: #{forward.1} parent=0 // pred_check
    _
  $region11: #{forward.1} parent=0 // pred_check_branch
    %19 = sbr.rel (0) target = $region13
  $region12: #{forward.1} parent=0 // pred_region
    _
  $region13: #{forward.1} parent=0 // pred_fallthru
    _
  // Predicated region
  $region14: #{forward.1} parent=0 // pred_check
    _
  $region15: #{forward.1} parent=0 // pred_check_branch
    %21 = sbr.rel (0) target = $region17
  $region16: #{forward.1} parent=0 // pred_region
    _
  $region17: #{forward.1} parent=0 // pred_fallthru
    _
  // Predicated region
  $region18: #{forward.1} parent=0 // pred_check
    _
  $region19: #{forward.1} parent=0 // pred_check_branch
    %23 = sbr.rel (0) target = $region21
  $region20: #{forward.1} parent=0 // pred_region
    _
  $region21: #{forward.1} parent=0 // pred_fallthru
    _
  // Predicated region
  $region22: #{forward.1} parent=0 // pred_check
    _
  $region23: #{forward.1} parent=0 // pred_check_branch
    %25 = sbr.rel (0) target = $region25
  $region24: #{forward.1} parent=0 // pred_region
    _
  $region25: #{forward.1} parent=0 // pred_fallthru
    _
  // Predicated region
  $region26: #{forward.1} parent=0 // pred_check
    _
  $region27: #{forward.1} parent=0 // pred_check_branch
    %27 = sbr.rel (0) target = $region29
  $region28: #{forward.1} parent=0 // pred_region
    _
  $region29: #{forward.1} parent=0 // pred_fallthru
    _
  // Predicated region
  $region30: #{forward.1} parent=0 // pred_check
    _
  $region31: #{forward.1} parent=0 // pred_check_branch
    %29 = sbr.rel (0) target = $region33
  $region32: #{forward.1} parent=0 // pred_region
    _
  $region33: #{forward.1} parent=0 // pred_fallthru
    _
  // Predicated region
  $region34: #{forward.1} parent=0 // pred_check
    _
  $region35: #{forward.1} parent=0 // pred_check_branch
    %31 = sbr.rel (0) target = $region37
  $region36: #{forward.1} parent=0 // pred_region
    _
  $region37: #{forward.1} parent=0 // pred_fallthru
    _
  %vm33 = vcmask 516096
  %vm34 = vsmask.f32 256
  %vm35 = vmand %vm33, %vm34
  %v36 = vld [vmem:[#allocation2] sm:$0x1]
  %v37 = vsel %vm35, 0, %v36
  %38 = vst [vmem:[#allocation2] sm:$0x1] %v37
  %v39 = vld [vmem:[#allocation2 + $0xc] sm:$0x1]
  %v40 = vsel %vm35, 0, %v39
  %41 = vst [vmem:[#allocation2 + $0xc] sm:$0x1] %v40
  %vm42 = vsmask.f32 7938
  %vm43 = vmand %vm33, %vm42
  %v44 = vld [vmem:[#allocation2 + $0x8] sm:$0x1]
  %v45 = vsel %vm43, 0, %v44
  %46 = vst [vmem:[#allocation2 + $0x8] sm:$0x1] %v45
  %v47 = vld [vmem:[#allocation2 + $0x14] sm:$0x1]
  %v48 = vsel %vm43, 0, %v47
  %49 = vst [vmem:[#allocation2 + $0x14] sm:$0x1] %v48
  %v50 = vld [vmem:[%s0] sm:$0xf]
  %v51 = vld [vmem:[%s0 + $0x4] sm:$0xf]
  %v52 = vld [vmem:[%s0 + $0x8] sm:$0xf]
  %v53 = vld [vmem:[%s0 + $0xc] sm:$0xf]
  %vm54 = vsmask.f32 4368
  %vm55 = vmor %vm34, %vm54
  %v57 = vshrl.u32 %v50, 16
  %v59 = vrot.slane %v57, 7
  %v60 = vshll.u32 %v50, 16
  %v62 = vor.u32 %v59, %v60
  %v63 = vrot.slane %v59, 4
  %v65 = vshrl.u32 %v51, 16
  %v67 = vrot.slane %v65, 7
  %v68 = vshll.u32 %v51, 16
  %v70 = vor.u32 %v67, %v68
  %v71 = vsel %vm55, %v63, %v70
  %v72 = vrot.slane %v67, 4
  %v74 = vshrl.u32 %v52, 16
  %v76 = vrot.slane %v74, 7
  %v77 = vshll.u32 %v52, 16
  %v79 = vor.u32 %v76, %v77
  %v80 = vrot.slane %v76, 4
  %v82 = vshrl.u32 %v53, 16
  %v84 = vrot.slane %v82, 7
  %v85 = vshll.u32 %v53, 16
  %v87 = vor.u32 %v84, %v85
  %v88 = vsel %vm55, %v80, %v87
  %v89 = vrot.slane %v84, 4
  %vm96 = vcmask 519168
  %vm97 = vmand %vm96, %vm42
  %v98 = vld [vmem:[#allocation2] sm:$0xf]
  %v99 = vsel %vm97, %v62, %v98
  %100 = vst [vmem:[#allocation2] sm:$0xf] %v99
  %vm101 = vcmask 519168
  %102 = vst.msk [vmem:[#allocation2 + $0x4] sm:$0xf] %vm101, %v71
  %v103 = vld [vmem:[#allocation2 + $0x8] sm:$0x1]
  %v104 = vsel %vm35, %v72, %v103
  %105 = vst [vmem:[#allocation2 + $0x8] sm:$0x1] %v104
  %v106 = vld [vmem:[#allocation2 + $0xc] sm:$0xf]
  %v107 = vsel %vm97, %v79, %v106
  %108 = vst [vmem:[#allocation2 + $0xc] sm:$0xf] %v107
  %109 = vst.msk [vmem:[#allocation2 + $0x10] sm:$0xf] %vm101, %v88
  %v110 = vld [vmem:[#allocation2 + $0x14] sm:$0x1]
  %v111 = vsel %vm35, %v89, %v110
  %112 = vst [vmem:[#allocation2 + $0x14] sm:$0x1] %v111
  %v113 = vld [vmem:[#allocation2] sm:$0xf]
  %v114 = vld [vmem:[#allocation2 + $0x4] sm:$0xf]
  %v115 = vld [vmem:[#allocation2 + $0xc] sm:$0xf]
  %v116 = vld [vmem:[#allocation2 + $0x10] sm:$0xf]
  %v117 = vld [vmem:[%s1] sm:$0xf]
  %v118 = vld [vmem:[%s1 + $0x4] sm:$0xf]
  %v119 = vld [vmem:[%s1 + $0x8] sm:$0xf]
  %v120 = vld [vmem:[%s1 + $0xc] sm:$0xf]
  %v121 = vld [vmem:[%s1 + $0x10] sm:$0xf]
  %v122 = vld [vmem:[%s1 + $0x14] sm:$0xf]
  %v123 = vld [vmem:[%s1 + $0x18] sm:$0xf]
  %v124 = vld [vmem:[%s1 + $0x1c] sm:$0xf]
  %v125 = vld [vmem:[#allocation2 + $0x8] sm:$0x1]
  %v126 = vld [vmem:[#allocation2 + $0x14] sm:$0x1]
  %vm127 = vsmask.f32 3328
  %vm128 = vsmask.f32 7440
  %vm129 = vmor %vm127, %vm128
  %v131 = vshrl.u32 %v113, 16
  %v133 = vrot.slane %v131, 4
  %v134 = vshll.u32 %v113, 16
  %v136 = vrot.slane %v134, 5
  %v137 = vor.u32 %v133, %v136
  %v138 = vrot.slane %v137, 4
  %v140 = vshll.u32 %v114, 16
  %v142 = vrot.slane %v140, 5
  %v143 = vsel %vm129, %v138, %v142
  %v144 = vshrl.u32 %v114, 16
  %v146 = vrot.slane %v144, 4
  %v147 = vor.u32 %v146, %v142
  %v148 = vrot.slane %v147, 4
  %v150 = vshll.u32 %v125, 16
  %v152 = vrot.slane %v150, 5
  %v153 = vsel %vm129, %v148, %v152
  %v155 = vshrl.u32 %v115, 16
  %v157 = vrot.slane %v155, 4
  %v158 = vshll.u32 %v115, 16
  %v160 = vrot.slane %v158, 5
  %v161 = vor.u32 %v157, %v160
  %v162 = vrot.slane %v161, 4
  %v164 = vshll.u32 %v116, 16
  %v166 = vrot.slane %v164, 5
  %v167 = vsel %vm129, %v162, %v166
  %v168 = vshrl.u32 %v116, 16
  %v170 = vrot.slane %v168, 4
  %v171 = vor.u32 %v170, %v166
  %v172 = vrot.slane %v171, 4
  %v174 = vshll.u32 %v126, 16
  %v176 = vrot.slane %v174, 5
  %v177 = vsel %vm129, %v172, %v176
  %s178 = scalar_lea.vmem %s1, 32
  %v179 = vld [vmem:[%s178] sm:$0xf]
  %v180 = vld [vmem:[%s178 + $0x4] sm:$0xf]
  %v181 = vld [vmem:[%s178 + $0x8] sm:$0xf]
  %v182 = vld [vmem:[%s178 + $0xc] sm:$0xf]
  %v183 = vld [vmem:[%s178 + $0x10] sm:$0xf]
  %v184 = vld [vmem:[%s178 + $0x14] sm:$0xf]
  %v185 = vld [vmem:[%s178 + $0x18] sm:$0xf]
  %v186 = vld [vmem:[%s178 + $0x1c] sm:$0xf]
  %v187 = vunpack.c.l.b16 %v143
  %v188 = vunpack.c.l.b16 %v153
  %v189 = vunpack.c.l.b16 %v167
  %v190 = vunpack.c.l.b16 %v177
  %v191 = vpack.c.b16 %v188, %v187
  %v192 = vpack.c.b16 %v190, %v189
  %v201 = vunpack.c.l.b16 %v179
  %v202 = vunpack.c.l.b16 %v180
  %v203 = vunpack.c.l.b16 %v181
  %v204 = vunpack.c.l.b16 %v182
  %v205 = vunpack.c.l.b16 %v183
  %v206 = vunpack.c.l.b16 %v184
  %v207 = vunpack.c.l.b16 %v185
  %v208 = vunpack.c.l.b16 %v186
  %v209 = vpack.c.b16 %v202, %v201
  %v210 = vpack.c.b16 %v204, %v203
  %v211 = vpack.c.b16 %v206, %v205
  %v212 = vpack.c.b16 %v208, %v207
  %vm217 = vcmask 523264
  %v219 = vsel %vm217, %v191, 0
  %v222 = vsel %vm217, %v192, 0
  %224 = vmatprep.subr.bf16.mxu0 0
  %225 = vmatpush1.bf16.msra.mxu0 0
  %226 = vmatprep.subr.bf16.mxu0 0
  %227 = vmatpush1.bf16.msra.mxu0 0
  %228 = vmatprep.subr.bf16.mxu0 0
  %229 = vmatpush1.bf16.msra.mxu0 0
  %230 = vmatprep.subr.bf16.mxu0 0
  %231 = vmatpush1.bf16.msra.mxu0 0
  %232 = vmatprep.subr.bf16.mxu0 0
  %233 = vmatpush1.bf16.msra.mxu0 %v212
  %234 = vmatprep.subr.bf16.mxu0 0
  %235 = vmatpush1.bf16.msra.mxu0 %v211
  %236 = vmatprep.subr.bf16.mxu0 0
  %237 = vmatpush1.bf16.msra.mxu0 %v210
  %238 = vmatprep.subr.bf16.mxu0 0
  %239 = vmatpush1.bf16.msra.mxu0 %v209
  %240 = vmatprep.subr.bf16.mxu0 0
  %241 = vmatpush2.bf16.msra.mxu0 0
  %242 = vmatprep.subr.bf16.mxu0 0
  %243 = vmatpush2.bf16.msra.mxu0 0
  %244 = vmatprep.subr.bf16.mxu0 0
  %245 = vmatpush2.bf16.msra.mxu0 0
  %246 = vmatprep.subr.bf16.mxu0 0
  %247 = vmatpush2.bf16.msra.mxu0 0
  %248 = vmatprep.subr.bf16.mxu0 0
  %249 = vmatpush2.bf16.msra.mxu0 0
  %250 = vmatprep.subr.bf16.mxu0 0
  %251 = vmatpush2.bf16.msra.mxu0 0
  %252 = vmatprep.subr.bf16.mxu0 0
  %253 = vmatpush2.bf16.msra.mxu0 0
  %254 = vmatprep.subr.bf16.mxu0 0
  %255 = vmatpush2.bf16.msra.mxu0 0
  %256 = vmatprep.mubr.bf16.mxu0 0
  %257 = vmatmul.mubr.bf16.gmra.mxu0 %v219
  %v258 = vpop.f32.mrf.mxu0
  %v259 = vadd.f32 0.0, %v258
  %v260 = vpop.f32.mrf.mxu0
  %v261 = vpop.f32.mrf.mxu0
  %v262 = vadd.f32 0.0, %v261
  %v263 = vpop.f32.mrf.mxu0
  %264 = vmatprep.mubr.bf16.mxu0 0
  %265 = vmatmul.mubr.bf16.gmra.mxu0 %v222
  %v266 = vpop.f32.mrf.mxu0
  %v267 = vadd.f32 0.0, %v266
  %v268 = vpop.f32.mrf.mxu0
  %v269 = vpop.f32.mrf.mxu0
  %v270 = vadd.f32 0.0, %v269
  %v271 = vpop.f32.mrf.mxu0
  %272 = vdwg.mxu0
  %v277 = vunpack.c.l.b16 %v113
  %v278 = vunpack.c.l.b16 %v114
  %v279 = vunpack.c.l.b16 %v115
  %v280 = vunpack.c.l.b16 %v116
  %v281 = vpack.c.b16 %v278, %v277
  %v282 = vpack.c.b16 %v280, %v279
  %v291 = vunpack.c.l.b16 %v117
  %v292 = vunpack.c.l.b16 %v118
  %v293 = vunpack.c.l.b16 %v119
  %v294 = vunpack.c.l.b16 %v120
  %v295 = vunpack.c.l.b16 %v121
  %v296 = vunpack.c.l.b16 %v122
  %v297 = vunpack.c.l.b16 %v123
  %v298 = vunpack.c.l.b16 %v124
  %v299 = vpack.c.b16 %v292, %v291
  %v300 = vpack.c.b16 %v294, %v293
  %v301 = vpack.c.b16 %v296, %v295
  %v302 = vpack.c.b16 %v298, %v297
  %v308 = vsel %vm217, %v281, 0
  %v311 = vsel %vm217, %v282, 0
  %313 = vmatprep.subr.bf16.mxu0 0
  %314 = vmatpush1.bf16.msra.mxu0 0
  %315 = vmatprep.subr.bf16.mxu0 0
  %316 = vmatpush1.bf16.msra.mxu0 0
  %317 = vmatprep.subr.bf16.mxu0 0
  %318 = vmatpush1.bf16.msra.mxu0 0
  %319 = vmatprep.subr.bf16.mxu0 0
  %320 = vmatpush1.bf16.msra.mxu0 0
  %321 = vmatprep.subr.bf16.mxu0 0
  %322 = vmatpush1.bf16.msra.mxu0 %v302
  %323 = vmatprep.subr.bf16.mxu0 0
  %324 = vmatpush1.bf16.msra.mxu0 %v301
  %325 = vmatprep.subr.bf16.mxu0 0
  %326 = vmatpush1.bf16.msra.mxu0 %v300
  %327 = vmatprep.subr.bf16.mxu0 0
  %328 = vmatpush1.bf16.msra.mxu0 %v299
  %329 = vmatprep.subr.bf16.mxu0 0
  %330 = vmatpush2.bf16.msra.mxu0 0
  %331 = vmatprep.subr.bf16.mxu0 0
  %332 = vmatpush2.bf16.msra.mxu0 0
  %333 = vmatprep.subr.bf16.mxu0 0
  %334 = vmatpush2.bf16.msra.mxu0 0
  %335 = vmatprep.subr.bf16.mxu0 0
  %336 = vmatpush2.bf16.msra.mxu0 0
  %337 = vmatprep.subr.bf16.mxu0 0
  %338 = vmatpush2.bf16.msra.mxu0 0
  %339 = vmatprep.subr.bf16.mxu0 0
  %340 = vmatpush2.bf16.msra.mxu0 0
  %341 = vmatprep.subr.bf16.mxu0 0
  %342 = vmatpush2.bf16.msra.mxu0 0
  %343 = vmatprep.subr.bf16.mxu0 0
  %344 = vmatpush2.bf16.msra.mxu0 0
  %345 = vmatprep.mubr.bf16.mxu0 0
  %346 = vmatmul.mubr.bf16.gmra.mxu0 %v308
  %v347 = vpop.f32.mrf.mxu0
  %v348 = vadd.f32 %v259, %v347
  %v349 = vpop.f32.mrf.mxu0
  %v350 = vpop.f32.mrf.mxu0
  %v351 = vadd.f32 %v262, %v350
  %v352 = vpop.f32.mrf.mxu0
  %353 = vmatprep.mubr.bf16.mxu0 0
  %354 = vmatmul.mubr.bf16.gmra.mxu0 %v311
  %v355 = vpop.f32.mrf.mxu0
  %v356 = vadd.f32 %v267, %v355
  %v357 = vpop.f32.mrf.mxu0
  %v358 = vpop.f32.mrf.mxu0
  %v359 = vadd.f32 %v270, %v358
  %v360 = vpop.f32.mrf.mxu0
  %361 = vdwg.mxu0
  %v362 = vld [vmem:[#allocation2] sm:$0xe]
  %v363 = vld [vmem:[#allocation2 + $0xc] sm:$0xe]
  %vm368 = vcmask 1042432
  %vm369 = vcmask 1046532
  %vm370 = vmor %vm368, %vm369
  %v371 = vrot.slane %v362, 5
  %v372 = vrot.slane %v371, 4
  %v373 = vrot.slane %v114, 5
  %v374 = vsel %vm370, %v372, %v373
  %v375 = vrot.slane %v373, 4
  %v376 = vrot.slane %v125, 5
  %v377 = vsel %vm370, %v375, %v376
  %v378 = vrot.slane %v363, 5
  %v379 = vrot.slane %v378, 4
  %v380 = vrot.slane %v116, 5
  %v381 = vsel %vm370, %v379, %v380
  %v382 = vrot.slane %v380, 4
  %v383 = vrot.slane %v126, 5
  %v384 = vsel %vm370, %v382, %v383
  %s385 = scalar_lea.vmem %s1, 64
  %v386 = vld [vmem:[%s385] sm:$0xf]
  %v387 = vld [vmem:[%s385 + $0x4] sm:$0xf]
  %v388 = vld [vmem:[%s385 + $0x8] sm:$0xf]
  %v389 = vld [vmem:[%s385 + $0xc] sm:$0xf]
  %v390 = vld [vmem:[%s385 + $0x10] sm:$0xf]
  %v391 = vld [vmem:[%s385 + $0x14] sm:$0xf]
  %v392 = vld [vmem:[%s385 + $0x18] sm:$0xf]
  %v393 = vld [vmem:[%s385 + $0x1c] sm:$0xf]
  %v394 = vunpack.c.l.b16 %v374
  %v395 = vunpack.c.l.b16 %v377
  %v396 = vunpack.c.l.b16 %v381
  %v397 = vunpack.c.l.b16 %v384
  %v398 = vpack.c.b16 %v395, %v394
  %v399 = vpack.c.b16 %v397, %v396
  %v408 = vunpack.c.l.b16 %v386
  %v409 = vunpack.c.l.b16 %v387
  %v410 = vunpack.c.l.b16 %v388
  %v411 = vunpack.c.l.b16 %v389
  %v412 = vunpack.c.l.b16 %v390
  %v413 = vunpack.c.l.b16 %v391
  %v414 = vunpack.c.l.b16 %v392
  %v415 = vunpack.c.l.b16 %v393
  %v416 = vpack.c.b16 %v409, %v408
  %v417 = vpack.c.b16 %v411, %v410
  %v418 = vpack.c.b16 %v413, %v412
  %v419 = vpack.c.b16 %v415, %v414
  %v425 = vsel %vm217, %v398, 0
  %v428 = vsel %vm217, %v399, 0
  %430 = vmatprep.subr.bf16.mxu0 0
  %431 = vmatpush1.bf16.msra.mxu0 0
  %432 = vmatprep.subr.bf16.mxu0 0
  %433 = vmatpush1.bf16.msra.mxu0 0
  %434 = vmatprep.subr.bf16.mxu0 0
  %435 = vmatpush1.bf16.msra.mxu0 0
  %436 = vmatprep.subr.bf16.mxu0 0
  %437 = vmatpush1.bf16.msra.mxu0 0
  %438 = vmatprep.subr.bf16.mxu0 0
  %439 = vmatpush1.bf16.msra.mxu0 %v419
  %440 = vmatprep.subr.bf16.mxu0 0
  %441 = vmatpush1.bf16.msra.mxu0 %v418
  %442 = vmatprep.subr.bf16.mxu0 0
  %443 = vmatpush1.bf16.msra.mxu0 %v417
  %444 = vmatprep.subr.bf16.mxu0 0
  %445 = vmatpush1.bf16.msra.mxu0 %v416
  %446 = vmatprep.subr.bf16.mxu0 0
  %447 = vmatpush2.bf16.msra.mxu0 0
  %448 = vmatprep.subr.bf16.mxu0 0
  %449 = vmatpush2.bf16.msra.mxu0 0
  %450 = vmatprep.subr.bf16.mxu0 0
  %451 = vmatpush2.bf16.msra.mxu0 0
  %452 = vmatprep.subr.bf16.mxu0 0
  %453 = vmatpush2.bf16.msra.mxu0 0
  %454 = vmatprep.subr.bf16.mxu0 0
  %455 = vmatpush2.bf16.msra.mxu0 0
  %456 = vmatprep.subr.bf16.mxu0 0
  %457 = vmatpush2.bf16.msra.mxu0 0
  %458 = vmatprep.subr.bf16.mxu0 0
  %459 = vmatpush2.bf16.msra.mxu0 0
  %460 = vmatprep.subr.bf16.mxu0 0
  %461 = vmatpush2.bf16.msra.mxu0 0
  %462 = vmatprep.mubr.bf16.mxu0 0
  %463 = vmatmul.mubr.bf16.gmra.mxu0 %v425
  %v464 = vpop.f32.mrf.mxu0
  %v465 = vadd.f32 0.0, %v464
  %v466 = vpop.f32.mrf.mxu0
  %v467 = vpop.f32.mrf.mxu0
  %v468 = vadd.f32 0.0, %v467
  %v469 = vpop.f32.mrf.mxu0
  %470 = vmatprep.mubr.bf16.mxu0 0
  %471 = vmatmul.mubr.bf16.gmra.mxu0 %v428
  %v472 = vpop.f32.mrf.mxu0
  %v473 = vadd.f32 0.0, %v472
  %v474 = vpop.f32.mrf.mxu0
  %v475 = vpop.f32.mrf.mxu0
  %v476 = vadd.f32 0.0, %v475
  %v477 = vpop.f32.mrf.mxu0
  %478 = vdwg.mxu0
  %v479 = vadd.f32 %v348, %v465
  %v480 = vadd.f32 %v351, %v468
  %v481 = vadd.f32 %v356, %v473
  %v482 = vadd.f32 %v359, %v476
  %v483 = vld [vmem:[%s3] sm:$0x1]
  %v485 = vlaneseq
  %v486 = vshrl.u32 %v485, 7
  %v487 = vsub.s32 0, %v486
  %v488 = vrot.slane %v483, %v487
  %v490 = vadd.f32 %v479, %v488
  %v491 = vadd.f32 %v480, %v488
  %v492 = vadd.f32 %v481, %v488
  %v493 = vadd.f32 %v482, %v488
  %v494 = vld [vmem:[%s5] sm:$0x1]
  %v495 = vld [vmem:[%s6] sm:$0x1]
  %vm496 = vcmp.gt.f32.partialorder %v490, 0.0
  %vm497 = vcmp.gt.f32.partialorder %v491, 0.0
  %vm498 = vcmp.gt.f32.partialorder %v492, 0.0
  %vm499 = vcmp.gt.f32.partialorder %v493, 0.0
  %v500 = vmul.f32 %v490, 0.01
  %v501 = vmul.f32 %v491, 0.01
  %v502 = vmul.f32 %v492, 0.01
  %v503 = vmul.f32 %v493, 0.01
  %v504 = vsel %vm496, %v490, %v500
  %v505 = vsel %vm497, %v491, %v501
  %v506 = vsel %vm498, %v492, %v502
  %v507 = vsel %vm499, %v493, %v503
  %v508 = vadd.f32 %v504, %v505
  %v509 = vadd.f32 %v508, %v506
  %v510 = vadd.f32 %v509, %v507
  %v511 = vrot.slane %v510, 4
  %v512 = vadd.f32 %v510, %v511
  %v513 = vrot.slane %v512, 2
  %v514 = vadd.f32 %v512, %v513
  %v515 = vrot.slane %v514, 1
  %v516 = vadd.f32 %v514, %v515
  %v517 = vmul.f32 %v504, %v504
  %v518 = vmul.f32 %v505, %v505
  %v519 = vmul.f32 %v506, %v506
  %v520 = vmul.f32 %v507, %v507
  %v521 = vadd.f32 %v517, %v518
  %v522 = vadd.f32 %v521, %v519
  %v523 = vadd.f32 %v522, %v520
  %v524 = vrot.slane %v523, 4
  %v525 = vadd.f32 %v523, %v524
  %v526 = vrot.slane %v525, 2
  %v527 = vadd.f32 %v525, %v526
  %v528 = vrot.slane %v527, 1
  %v529 = vadd.f32 %v527, %v528
  %vm530 = vcmask 1040384
  %v531 = vsel %vm530, %v516, %v529
  %532 = vrot.lane.b32.xlu0 %v531, 8
  %v533 = vpop.permute.xlu0 %532
  %v534 = vadd.f32 %v531, %v533
  %535 = vrot.lane.b32.xlu0 %v534, 16
  %v536 = vpop.permute.xlu0 %535
  %v537 = vadd.f32 %v534, %v536
  %538 = vrot.lane.b32.xlu0 %v537, 32
  %v539 = vpop.permute.xlu0 %538
  %v540 = vadd.f32 %v537, %v539
  %541 = vrot.lane.b32.xlu0 %v540, 64
  %v542 = vpop.permute.xlu0 %541
  %v543 = vadd.f32 %v540, %v542
  %v544 = vmul.f32 %v543, 0.001953125
  %v545 = vmul.f32 %v544, %v544
  %v547 = vrot.slane %v545, 7
  %v549 = vsub.f32 %v544, %v547
  %v550 = vadd.f32 %v549, 1e-05
  %v551 = vrsqrt.pop %v550
  %v554 = vunpack.c.l.s4 1966171168
  %v555 = vunpack.c.0.s8 %v554
  %v556 = vlaneseq
  %v557 = vshrl.u32 %v556, 7
  %v558 = vsub.s32 %v555, %v557
  %v559 = vrot.slane %v551, %v558
  %v560 = vcombine.high %v559, %v559
  %v562 = vunpack.c.l.s4 1966171168
  %v563 = vunpack.c.0.s8 %v562
  %v564 = vlaneseq
  %v565 = vshrl.u32 %v564, 7
  %v566 = vsub.s32 %v563, %v565
  %v567 = vrot.slane %v560, %v566
  %v569 = vmul.f32 %v494, %v567
  %v570 = vmul.f32 %v544, %v569
  %v571 = vsub.f32 %v495, %v570
  %v573 = vlaneseq
  %v574 = vshrl.u32 %v573, 7
  %v575 = vsub.s32 0, %v574
  %v576 = vrot.slane %v569, %v575
  %v578 = vmul.f32 %v504, %v576
  %v579 = vmul.f32 %v505, %v576
  %v580 = vmul.f32 %v506, %v576
  %v581 = vmul.f32 %v507, %v576
  %v583 = vlaneseq
  %v584 = vshrl.u32 %v583, 7
  %v585 = vsub.s32 0, %v584
  %v586 = vrot.slane %v571, %v585
  %v588 = vadd.f32 %v578, %v586
  %v589 = vadd.f32 %v579, %v586
  %v590 = vadd.f32 %v580, %v586
  %v591 = vadd.f32 %v581, %v586
  %vm592 = vcmask 1040384
  %vm593 = vmand %vm592, %vm34
  %v594 = vld [vmem:[#allocation3] sm:$0x1]
  %v595 = vsel %vm593, 0, %v594
  %596 = vst [vmem:[#allocation3] sm:$0x1] %v595
  %v597 = vld [vmem:[#allocation3 + $0xc] sm:$0x1]
  %v598 = vsel %vm593, 0, %v597
  %599 = vst [vmem:[#allocation3 + $0xc] sm:$0x1] %v598
  %vm600 = vmand %vm592, %vm42
  %v601 = vld [vmem:[#allocation3 + $0x8] sm:$0x1]
  %v602 = vsel %vm600, 0, %v601
  %603 = vst [vmem:[#allocation3 + $0x8] sm:$0x1] %v602
  %v604 = vld [vmem:[#allocation3 + $0x14] sm:$0x1]
  %v605 = vsel %vm600, 0, %v604
  %606 = vst [vmem:[#allocation3 + $0x14] sm:$0x1] %v605
  %v607 = vpack.c.bf16 %v589, %v588
  %v608 = vpack.c.bf16 %v591, %v590
  %v611 = vunpack.c.l.b16 %v607
  %v612 = vunpack.c.h.b16 %v607
  %v613 = vunpack.c.l.b16 %v608
  %v614 = vunpack.c.h.b16 %v608
  %v615 = vpack.c.b16 %v611, %v611
  %v616 = vpack.c.b16 %v612, %v612
  %v617 = vpack.c.b16 %v613, %v613
  %v618 = vpack.c.b16 %v614, %v614
  %v620 = vshrl.u32 %v615, 16
  %v622 = vrot.slane %v620, 7
  %v623 = vshll.u32 %v615, 16
  %v625 = vor.u32 %v622, %v623
  %v626 = vrot.slane %v622, 4
  %v628 = vshrl.u32 %v616, 16
  %v630 = vrot.slane %v628, 7
  %v631 = vshll.u32 %v616, 16
  %v633 = vor.u32 %v630, %v631
  %v634 = vsel %vm55, %v626, %v633
  %v635 = vrot.slane %v630, 4
  %v637 = vshrl.u32 %v617, 16
  %v639 = vrot.slane %v637, 7
  %v640 = vshll.u32 %v617, 16
  %v642 = vor.u32 %v639, %v640
  %v643 = vrot.slane %v639, 4
  %v645 = vshrl.u32 %v618, 16
  %v647 = vrot.slane %v645, 7
  %v648 = vshll.u32 %v618, 16
  %v650 = vor.u32 %v647, %v648
  %v651 = vsel %vm55, %v643, %v650
  %v652 = vrot.slane %v647, 4
  %vm659 = vcmask 1043456
  %vm660 = vmand %vm659, %vm42
  %v661 = vld [vmem:[#allocation3] sm:$0xf]
  %v662 = vsel %vm660, %v625, %v661
  %663 = vst [vmem:[#allocation3] sm:$0xf] %v662
  %664 = vst [vmem:[#allocation3 + $0x4] sm:$0xf] %v634
  %v665 = vld [vmem:[#allocation3 + $0x8] sm:$0x1]
  %v666 = vsel %vm593, %v635, %v665
  %667 = vst [vmem:[#allocation3 + $0x8] sm:$0x1] %v666
  %v668 = vld [vmem:[#allocation3 + $0xc] sm:$0xf]
  %v669 = vsel %vm660, %v642, %v668
  %670 = vst [vmem:[#allocation3 + $0xc] sm:$0xf] %v669
  %671 = vst [vmem:[#allocation3 + $0x10] sm:$0xf] %v651
  %v672 = vld [vmem:[#allocation3 + $0x14] sm:$0x1]
  %v673 = vsel %vm593, %v652, %v672
  %674 = vst [vmem:[#allocation3 + $0x14] sm:$0x1] %v673
  %v675 = vld [vmem:[#allocation3] sm:$0xf]
  %v676 = vld [vmem:[#allocation3 + $0x4] sm:$0xf]
  %v677 = vld [vmem:[#allocation3 + $0xc] sm:$0xf]
  %v678 = vld [vmem:[#allocation3 + $0x10] sm:$0xf]
  %v679 = vld [vmem:[%s2] sm:$0xf]
  %v680 = vld [vmem:[%s2 + $0x4] sm:$0xf]
  %v681 = vld [vmem:[%s2 + $0x8] sm:$0xf]
  %v682 = vld [vmem:[%s2 + $0xc] sm:$0xf]
  %v683 = vld [vmem:[%s2 + $0x10] sm:$0xf]
  %v684 = vld [vmem:[%s2 + $0x14] sm:$0xf]
  %v685 = vld [vmem:[%s2 + $0x18] sm:$0xf]
  %v686 = vld [vmem:[%s2 + $0x1c] sm:$0xf]
  %v687 = vld [vmem:[%s2 + $0x20] sm:$0xf]
  %v688 = vld [vmem:[%s2 + $0x24] sm:$0xf]
  %v689 = vld [vmem:[%s2 + $0x28] sm:$0xf]
  %v690 = vld [vmem:[%s2 + $0x2c] sm:$0xf]
  %v691 = vld [vmem:[%s2 + $0x30] sm:$0xf]
  %v692 = vld [vmem:[%s2 + $0x34] sm:$0xf]
  %v693 = vld [vmem:[%s2 + $0x38] sm:$0xf]
  %v694 = vld [vmem:[%s2 + $0x3c] sm:$0xf]
  %v695 = vld [vmem:[#allocation3 + $0x8] sm:$0x1]
  %v696 = vld [vmem:[#allocation3 + $0x14] sm:$0x1]
  %v698 = vshrl.u32 %v675, 16
  %v700 = vrot.slane %v698, 4
  %v701 = vshll.u32 %v675, 16
  %v703 = vrot.slane %v701, 5
  %v704 = vor.u32 %v700, %v703
  %v705 = vrot.slane %v704, 4
  %v707 = vshll.u32 %v676, 16
  %v709 = vrot.slane %v707, 5
  %v710 = vsel %vm129, %v705, %v709
  %v711 = vshrl.u32 %v676, 16
  %v713 = vrot.slane %v711, 4
  %v714 = vor.u32 %v713, %v709
  %v715 = vrot.slane %v714, 4
  %v717 = vshll.u32 %v695, 16
  %v719 = vrot.slane %v717, 5
  %v720 = vsel %vm129, %v715, %v719
  %v722 = vshrl.u32 %v677, 16
  %v724 = vrot.slane %v722, 4
  %v725 = vshll.u32 %v677, 16
  %v727 = vrot.slane %v725, 5
  %v728 = vor.u32 %v724, %v727
  %v729 = vrot.slane %v728, 4
  %v731 = vshll.u32 %v678, 16
  %v733 = vrot.slane %v731, 5
  %v734 = vsel %vm129, %v729, %v733
  %v735 = vshrl.u32 %v678, 16
  %v737 = vrot.slane %v735, 4
  %v738 = vor.u32 %v737, %v733
  %v739 = vrot.slane %v738, 4
  %v741 = vshll.u32 %v696, 16
  %v743 = vrot.slane %v741, 5
  %v744 = vsel %vm129, %v739, %v743
  %s745 = scalar_lea.vmem %s2, 64
  %v746 = vld [vmem:[%s745] sm:$0xf]
  %v747 = vld [vmem:[%s745 + $0x4] sm:$0xf]
  %v748 = vld [vmem:[%s745 + $0x8] sm:$0xf]
  %v749 = vld [vmem:[%s745 + $0xc] sm:$0xf]
  %v750 = vld [vmem:[%s745 + $0x10] sm:$0xf]
  %v751 = vld [vmem:[%s745 + $0x14] sm:$0xf]
  %v752 = vld [vmem:[%s745 + $0x18] sm:$0xf]
  %v753 = vld [vmem:[%s745 + $0x1c] sm:$0xf]
  %v754 = vld [vmem:[%s745 + $0x20] sm:$0xf]
  %v755 = vld [vmem:[%s745 + $0x24] sm:$0xf]
  %v756 = vld [vmem:[%s745 + $0x28] sm:$0xf]
  %v757 = vld [vmem:[%s745 + $0x2c] sm:$0xf]
  %v758 = vld [vmem:[%s745 + $0x30] sm:$0xf]
  %v759 = vld [vmem:[%s745 + $0x34] sm:$0xf]
  %v760 = vld [vmem:[%s745 + $0x38] sm:$0xf]
  %v761 = vld [vmem:[%s745 + $0x3c] sm:$0xf]
  %v762 = vunpack.c.l.b16 %v710
  %v763 = vunpack.c.l.b16 %v720
  %v764 = vunpack.c.l.b16 %v734
  %v765 = vunpack.c.l.b16 %v744
  %v766 = vpack.c.b16 %v763, %v762
  %v767 = vpack.c.b16 %v765, %v764
  %v786 = vunpack.c.l.b16 %v746
  %v787 = vunpack.c.l.b16 %v747
  %v788 = vunpack.c.l.b16 %v748
  %v789 = vunpack.c.l.b16 %v749
  %v790 = vunpack.c.l.b16 %v750
  %v791 = vunpack.c.l.b16 %v751
  %v792 = vunpack.c.l.b16 %v752
  %v793 = vunpack.c.l.b16 %v753
  %v794 = vunpack.c.l.b16 %v754
  %v795 = vunpack.c.l.b16 %v755
  %v796 = vunpack.c.l.b16 %v756
  %v797 = vunpack.c.l.b16 %v757
  %v798 = vunpack.c.l.b16 %v758
  %v799 = vunpack.c.l.b16 %v759
  %v800 = vunpack.c.l.b16 %v760
  %v801 = vunpack.c.l.b16 %v761
  %v802 = vpack.c.b16 %v787, %v786
  %v803 = vpack.c.b16 %v789, %v788
  %v804 = vpack.c.b16 %v791, %v790
  %v805 = vpack.c.b16 %v793, %v792
  %v806 = vpack.c.b16 %v795, %v794
  %v807 = vpack.c.b16 %v797, %v796
  %v808 = vpack.c.b16 %v799, %v798
  %v809 = vpack.c.b16 %v801, %v800
  %818 = vmatprep.subr.bf16.mxu0 0
  %819 = vmatpush1.bf16.msra.mxu0 %v809
  %820 = vmatprep.subr.bf16.mxu0 0
  %821 = vmatpush1.bf16.msra.mxu0 %v808
  %822 = vmatprep.subr.bf16.mxu0 0
  %823 = vmatpush1.bf16.msra.mxu0 %v807
  %824 = vmatprep.subr.bf16.mxu0 0
  %825 = vmatpush1.bf16.msra.mxu0 %v806
  %826 = vmatprep.subr.bf16.mxu0 0
  %827 = vmatpush1.bf16.msra.mxu0 %v805
  %828 = vmatprep.subr.bf16.mxu0 0
  %829 = vmatpush1.bf16.msra.mxu0 %v804
  %830 = vmatprep.subr.bf16.mxu0 0
  %831 = vmatpush1.bf16.msra.mxu0 %v803
  %832 = vmatprep.subr.bf16.mxu0 0
  %833 = vmatpush1.bf16.msra.mxu0 %v802
  %834 = vmatprep.subr.bf16.mxu0 0
  %835 = vmatpush2.bf16.msra.mxu0 0
  %836 = vmatprep.subr.bf16.mxu0 0
  %837 = vmatpush2.bf16.msra.mxu0 0
  %838 = vmatprep.subr.bf16.mxu0 0
  %839 = vmatpush2.bf16.msra.mxu0 0
  %840 = vmatprep.subr.bf16.mxu0 0
  %841 = vmatpush2.bf16.msra.mxu0 0
  %842 = vmatprep.subr.bf16.mxu0 0
  %843 = vmatpush2.bf16.msra.mxu0 0
  %844 = vmatprep.subr.bf16.mxu0 0
  %845 = vmatpush2.bf16.msra.mxu0 0
  %846 = vmatprep.subr.bf16.mxu0 0
  %847 = vmatpush2.bf16.msra.mxu0 0
  %848 = vmatprep.subr.bf16.mxu0 0
  %849 = vmatpush2.bf16.msra.mxu0 0
  %850 = vmatprep.mubr.bf16.mxu0 0
  %851 = vmatmul.mubr.bf16.gmra.mxu0 %v766
  %v852 = vpop.f32.mrf.mxu0
  %v853 = vadd.f32 0.0, %v852
  %v854 = vpop.f32.mrf.mxu0
  %v855 = vpop.f32.mrf.mxu0
  %v856 = vadd.f32 0.0, %v855
  %v857 = vpop.f32.mrf.mxu0
  %858 = vmatprep.mubr.bf16.mxu0 0
  %859 = vmatmul.mubr.bf16.gmra.mxu0 %v767
  %v860 = vpop.f32.mrf.mxu0
  %v861 = vadd.f32 0.0, %v860
  %v862 = vpop.f32.mrf.mxu0
  %v863 = vpop.f32.mrf.mxu0
  %v864 = vadd.f32 0.0, %v863
  %v865 = vpop.f32.mrf.mxu0
  %866 = vdwg.mxu0
  %v871 = vunpack.c.l.b16 %v675
  %v872 = vunpack.c.l.b16 %v676
  %v873 = vunpack.c.l.b16 %v677
  %v874 = vunpack.c.l.b16 %v678
  %v875 = vpack.c.b16 %v872, %v871
  %v876 = vpack.c.b16 %v874, %v873
  %v895 = vunpack.c.l.b16 %v679
  %v896 = vunpack.c.l.b16 %v680
  %v897 = vunpack.c.l.b16 %v681
  %v898 = vunpack.c.l.b16 %v682
  %v899 = vunpack.c.l.b16 %v683
  %v900 = vunpack.c.l.b16 %v684
  %v901 = vunpack.c.l.b16 %v685
  %v902 = vunpack.c.l.b16 %v686
  %v903 = vunpack.c.l.b16 %v687
  %v904 = vunpack.c.l.b16 %v688
  %v905 = vunpack.c.l.b16 %v689
  %v906 = vunpack.c.l.b16 %v690
  %v907 = vunpack.c.l.b16 %v691
  %v908 = vunpack.c.l.b16 %v692
  %v909 = vunpack.c.l.b16 %v693
  %v910 = vunpack.c.l.b16 %v694
  %v911 = vpack.c.b16 %v896, %v895
  %v912 = vpack.c.b16 %v898, %v897
  %v913 = vpack.c.b16 %v900, %v899
  %v914 = vpack.c.b16 %v902, %v901
  %v915 = vpack.c.b16 %v904, %v903
  %v916 = vpack.c.b16 %v906, %v905
  %v917 = vpack.c.b16 %v908, %v907
  %v918 = vpack.c.b16 %v910, %v909
  %927 = vmatprep.subr.bf16.mxu0 0
  %928 = vmatpush1.bf16.msra.mxu0 %v918
  %929 = vmatprep.subr.bf16.mxu0 0
  %930 = vmatpush1.bf16.msra.mxu0 %v917
  %931 = vmatprep.subr.bf16.mxu0 0
  %932 = vmatpush1.bf16.msra.mxu0 %v916
  %933 = vmatprep.subr.bf16.mxu0 0
  %934 = vmatpush1.bf16.msra.mxu0 %v915
  %935 = vmatprep.subr.bf16.mxu0 0
  %936 = vmatpush1.bf16.msra.mxu0 %v914
  %937 = vmatprep.subr.bf16.mxu0 0
  %938 = vmatpush1.bf16.msra.mxu0 %v913
  %939 = vmatprep.subr.bf16.mxu0 0
  %940 = vmatpush1.bf16.msra.mxu0 %v912
  %941 = vmatprep.subr.bf16.mxu0 0
  %942 = vmatpush1.bf16.msra.mxu0 %v911
  %943 = vmatprep.subr.bf16.mxu0 0
  %944 = vmatpush2.bf16.msra.mxu0 0
  %945 = vmatprep.subr.bf16.mxu0 0
  %946 = vmatpush2.bf16.msra.mxu0 0
  %947 = vmatprep.subr.bf16.mxu0 0
  %948 = vmatpush2.bf16.msra.mxu0 0
  %949 = vmatprep.subr.bf16.mxu0 0
  %950 = vmatpush2.bf16.msra.mxu0 0
  %951 = vmatprep.subr.bf16.mxu0 0
  %952 = vmatpush2.bf16.msra.mxu0 0
  %953 = vmatprep.subr.bf16.mxu0 0
  %954 = vmatpush2.bf16.msra.mxu0 0
  %955 = vmatprep.subr.bf16.mxu0 0
  %956 = vmatpush2.bf16.msra.mxu0 0
  %957 = vmatprep.subr.bf16.mxu0 0
  %958 = vmatpush2.bf16.msra.mxu0 0
  %959 = vmatprep.mubr.bf16.mxu0 0
  %960 = vmatmul.mubr.bf16.gmra.mxu0 %v875
  %v961 = vpop.f32.mrf.mxu0
  %v962 = vadd.f32 %v853, %v961
  %v963 = vpop.f32.mrf.mxu0
  %v964 = vpop.f32.mrf.mxu0
  %v965 = vadd.f32 %v856, %v964
  %v966 = vpop.f32.mrf.mxu0
  %967 = vmatprep.mubr.bf16.mxu0 0
  %968 = vmatmul.mubr.bf16.gmra.mxu0 %v876
  %v969 = vpop.f32.mrf.mxu0
  %v970 = vadd.f32 %v861, %v969
  %v971 = vpop.f32.mrf.mxu0
  %v972 = vpop.f32.mrf.mxu0
  %v973 = vadd.f32 %v864, %v972
  %v974 = vpop.f32.mrf.mxu0
  %975 = vdwg.mxu0
  %v976 = vld [vmem:[#allocation3] sm:$0xe]
  %v977 = vld [vmem:[#allocation3 + $0xc] sm:$0xe]
  %v982 = vrot.slane %v976, 5
  %v983 = vrot.slane %v982, 4
  %v984 = vrot.slane %v676, 5
  %v985 = vsel %vm370, %v983, %v984
  %v986 = vrot.slane %v984, 4
  %v987 = vrot.slane %v695, 5
  %v988 = vsel %vm370, %v986, %v987
  %v989 = vrot.slane %v977, 5
  %v990 = vrot.slane %v989, 4
  %v991 = vrot.slane %v678, 5
  %v992 = vsel %vm370, %v990, %v991
  %v993 = vrot.slane %v991, 4
  %v994 = vrot.slane %v696, 5
  %v995 = vsel %vm370, %v993, %v994
  %s996 = scalar_lea.vmem %s2, 128
  %v997 = vld [vmem:[%s996] sm:$0xf]
  %v998 = vld [vmem:[%s996 + $0x4] sm:$0xf]
  %v999 = vld [vmem:[%s996 + $0x8] sm:$0xf]
  %v1000 = vld [vmem:[%s996 + $0xc] sm:$0xf]
  %v1001 = vld [vmem:[%s996 + $0x10] sm:$0xf]
  %v1002 = vld [vmem:[%s996 + $0x14] sm:$0xf]
  %v1003 = vld [vmem:[%s996 + $0x18] sm:$0xf]
  %v1004 = vld [vmem:[%s996 + $0x1c] sm:$0xf]
  %v1005 = vld [vmem:[%s996 + $0x20] sm:$0xf]
  %v1006 = vld [vmem:[%s996 + $0x24] sm:$0xf]
  %v1007 = vld [vmem:[%s996 + $0x28] sm:$0xf]
  %v1008 = vld [vmem:[%s996 + $0x2c] sm:$0xf]
  %v1009 = vld [vmem:[%s996 + $0x30] sm:$0xf]
  %v1010 = vld [vmem:[%s996 + $0x34] sm:$0xf]
  %v1011 = vld [vmem:[%s996 + $0x38] sm:$0xf]
  %v1012 = vld [vmem:[%s996 + $0x3c] sm:$0xf]
  %v1013 = vunpack.c.l.b16 %v985
  %v1014 = vunpack.c.l.b16 %v988
  %v1015 = vunpack.c.l.b16 %v992
  %v1016 = vunpack.c.l.b16 %v995
  %v1017 = vpack.c.b16 %v1014, %v1013
  %v1018 = vpack.c.b16 %v1016, %v1015
  %v1037 = vunpack.c.l.b16 %v997
  %v1038 = vunpack.c.l.b16 %v998
  %v1039 = vunpack.c.l.b16 %v999
  %v1040 = vunpack.c.l.b16 %v1000
  %v1041 = vunpack.c.l.b16 %v1001
  %v1042 = vunpack.c.l.b16 %v1002
  %v1043 = vunpack.c.l.b16 %v1003
  %v1044 = vunpack.c.l.b16 %v1004
  %v1045 = vunpack.c.l.b16 %v1005
  %v1046 = vunpack.c.l.b16 %v1006
  %v1047 = vunpack.c.l.b16 %v1007
  %v1048 = vunpack.c.l.b16 %v1008
  %v1049 = vunpack.c.l.b16 %v1009
  %v1050 = vunpack.c.l.b16 %v1010
  %v1051 = vunpack.c.l.b16 %v1011
  %v1052 = vunpack.c.l.b16 %v1012
  %v1053 = vpack.c.b16 %v1038, %v1037
  %v1054 = vpack.c.b16 %v1040, %v1039
  %v1055 = vpack.c.b16 %v1042, %v1041
  %v1056 = vpack.c.b16 %v1044, %v1043
  %v1057 = vpack.c.b16 %v1046, %v1045
  %v1058 = vpack.c.b16 %v1048, %v1047
  %v1059 = vpack.c.b16 %v1050, %v1049
  %v1060 = vpack.c.b16 %v1052, %v1051
  %1069 = vmatprep.subr.bf16.mxu0 0
  %1070 = vmatpush1.bf16.msra.mxu0 %v1060
  %1071 = vmatprep.subr.bf16.mxu0 0
  %1072 = vmatpush1.bf16.msra.mxu0 %v1059
  %1073 = vmatprep.subr.bf16.mxu0 0
  %1074 = vmatpush1.bf16.msra.mxu0 %v1058
  %1075 = vmatprep.subr.bf16.mxu0 0
  %1076 = vmatpush1.bf16.msra.mxu0 %v1057
  %1077 = vmatprep.subr.bf16.mxu0 0
  %1078 = vmatpush1.bf16.msra.mxu0 %v1056
  %1079 = vmatprep.subr.bf16.mxu0 0
  %1080 = vmatpush1.bf16.msra.mxu0 %v1055
  %1081 = vmatprep.subr.bf16.mxu0 0
  %1082 = vmatpush1.bf16.msra.mxu0 %v1054
  %1083 = vmatprep.subr.bf16.mxu0 0
  %1084 = vmatpush1.bf16.msra.mxu0 %v1053
  %1085 = vmatprep.subr.bf16.mxu0 0
  %1086 = vmatpush2.bf16.msra.mxu0 0
  %1087 = vmatprep.subr.bf16.mxu0 0
  %1088 = vmatpush2.bf16.msra.mxu0 0
  %1089 = vmatprep.subr.bf16.mxu0 0
  %1090 = vmatpush2.bf16.msra.mxu0 0
  %1091 = vmatprep.subr.bf16.mxu0 0
  %1092 = vmatpush2.bf16.msra.mxu0 0
  %1093 = vmatprep.subr.bf16.mxu0 0
  %1094 = vmatpush2.bf16.msra.mxu0 0
  %1095 = vmatprep.subr.bf16.mxu0 0
  %1096 = vmatpush2.bf16.msra.mxu0 0
  %1097 = vmatprep.subr.bf16.mxu0 0
  %1098 = vmatpush2.bf16.msra.mxu0 0
  %1099 = vmatprep.subr.bf16.mxu0 0
  %1100 = vmatpush2.bf16.msra.mxu0 0
  %1101 = vmatprep.mubr.bf16.mxu0 0
  %1102 = vmatmul.mubr.bf16.gmra.mxu0 %v1017
  %v1103 = vpop.f32.mrf.mxu0
  %v1104 = vadd.f32 0.0, %v1103
  %v1105 = vpop.f32.mrf.mxu0
  %v1106 = vpop.f32.mrf.mxu0
  %v1107 = vadd.f32 0.0, %v1106
  %v1108 = vpop.f32.mrf.mxu0
  %1109 = vmatprep.mubr.bf16.mxu0 0
  %1110 = vmatmul.mubr.bf16.gmra.mxu0 %v1018
  %v1111 = vpop.f32.mrf.mxu0
  %v1112 = vadd.f32 0.0, %v1111
  %v1113 = vpop.f32.mrf.mxu0
  %v1114 = vpop.f32.mrf.mxu0
  %v1115 = vadd.f32 0.0, %v1114
  %v1116 = vpop.f32.mrf.mxu0
  %1117 = vdwg.mxu0
  %v1118 = vadd.f32 %v962, %v1104
  %v1119 = vadd.f32 %v965, %v1107
  %v1120 = vadd.f32 %v970, %v1112
  %v1121 = vadd.f32 %v973, %v1115
  %v1122 = vld [vmem:[%s4] sm:$0x1]
  %v1124 = vlaneseq
  %v1125 = vshrl.u32 %v1124, 7
  %v1126 = vsub.s32 0, %v1125
  %v1127 = vrot.slane %v1122, %v1126
  %v1129 = vadd.f32 %v1118, %v1127
  %v1130 = vadd.f32 %v1119, %v1127
  %v1131 = vadd.f32 %v1120, %v1127
  %v1132 = vadd.f32 %v1121, %v1127
  %v1133 = vld [vmem:[%s7] sm:$0x1]
  %v1134 = vld [vmem:[%s8] sm:$0x1]
  %vm1135 = vcmp.gt.f32.partialorder %v1129, 0.0
  %vm1136 = vcmp.gt.f32.partialorder %v1130, 0.0
  %vm1137 = vcmp.gt.f32.partialorder %v1131, 0.0
  %vm1138 = vcmp.gt.f32.partialorder %v1132, 0.0
  %v1139 = vmul.f32 %v1129, 0.01
  %v1140 = vmul.f32 %v1130, 0.01
  %v1141 = vmul.f32 %v1131, 0.01
  %v1142 = vmul.f32 %v1132, 0.01
  %v1143 = vsel %vm1135, %v1129, %v1139
  %v1144 = vsel %vm1136, %v1130, %v1140
  %v1145 = vsel %vm1137, %v1131, %v1141
  %v1146 = vsel %vm1138, %v1132, %v1142
  %v1147 = vadd.f32 %v1143, %v1144
  %v1148 = vadd.f32 %v1147, %v1145
  %v1149 = vadd.f32 %v1148, %v1146
  %v1150 = vrot.slane %v1149, 4
  %v1151 = vadd.f32 %v1149, %v1150
  %v1152 = vrot.slane %v1151, 2
  %v1153 = vadd.f32 %v1151, %v1152
  %v1154 = vrot.slane %v1153, 1
  %v1155 = vadd.f32 %v1153, %v1154
  %v1156 = vmul.f32 %v1143, %v1143
  %v1157 = vmul.f32 %v1144, %v1144
  %v1158 = vmul.f32 %v1145, %v1145
  %v1159 = vmul.f32 %v1146, %v1146
  %v1160 = vadd.f32 %v1156, %v1157
  %v1161 = vadd.f32 %v1160, %v1158
  %v1162 = vadd.f32 %v1161, %v1159
  %v1163 = vrot.slane %v1162, 4
  %v1164 = vadd.f32 %v1162, %v1163
  %v1165 = vrot.slane %v1164, 2
  %v1166 = vadd.f32 %v1164, %v1165
  %v1167 = vrot.slane %v1166, 1
  %v1168 = vadd.f32 %v1166, %v1167
  %v1169 = vsel %vm530, %v1155, %v1168
  %1170 = vrot.lane.b32.xlu0 %v1169, 8
  %v1171 = vpop.permute.xlu0 %1170
  %v1172 = vadd.f32 %v1169, %v1171
  %1173 = vrot.lane.b32.xlu0 %v1172, 16
  %v1174 = vpop.permute.xlu0 %1173
  %v1175 = vadd.f32 %v1172, %v1174
  %1176 = vrot.lane.b32.xlu0 %v1175, 32
  %v1177 = vpop.permute.xlu0 %1176
  %v1178 = vadd.f32 %v1175, %v1177
  %1179 = vrot.lane.b32.xlu0 %v1178, 64
  %v1180 = vpop.permute.xlu0 %1179
  %v1181 = vadd.f32 %v1178, %v1180
  %v1182 = vmul.f32 %v1181, 0.001953125
  %v1183 = vmul.f32 %v1182, %v1182
  %v1185 = vrot.slane %v1183, 7
  %v1187 = vsub.f32 %v1182, %v1185
  %v1188 = vadd.f32 %v1187, 1e-05
  %v1189 = vrsqrt.pop %v1188
  %v1192 = vunpack.c.l.s4 1966171168
  %v1193 = vunpack.c.0.s8 %v1192
  %v1194 = vlaneseq
  %v1195 = vshrl.u32 %v1194, 7
  %v1196 = vsub.s32 %v1193, %v1195
  %v1197 = vrot.slane %v1189, %v1196
  %v1198 = vcombine.high %v1197, %v1197
  %v1200 = vunpack.c.l.s4 1966171168
  %v1201 = vunpack.c.0.s8 %v1200
  %v1202 = vlaneseq
  %v1203 = vshrl.u32 %v1202, 7
  %v1204 = vsub.s32 %v1201, %v1203
  %v1205 = vrot.slane %v1198, %v1204
  %v1207 = vmul.f32 %v1133, %v1205
  %v1208 = vmul.f32 %v1182, %v1207
  %v1209 = vsub.f32 %v1134, %v1208
  %v1211 = vlaneseq
  %v1212 = vshrl.u32 %v1211, 7
  %v1213 = vsub.s32 0, %v1212
  %v1214 = vrot.slane %v1207, %v1213
  %v1216 = vmul.f32 %v1143, %v1214
  %v1217 = vmul.f32 %v1144, %v1214
  %v1218 = vmul.f32 %v1145, %v1214
  %v1219 = vmul.f32 %v1146, %v1214
  %v1221 = vlaneseq
  %v1222 = vshrl.u32 %v1221, 7
  %v1223 = vsub.s32 0, %v1222
  %v1224 = vrot.slane %v1209, %v1223
  %v1226 = vadd.f32 %v1216, %v1224
  %v1227 = vadd.f32 %v1217, %v1224
  %v1228 = vadd.f32 %v1218, %v1224
  %v1229 = vadd.f32 %v1219, %v1224
  %1230 = vst [vmem:[%s9] sm:$0xff] %v1226
  %1231 = vst [vmem:[%s9 + $0x8] sm:$0xff] %v1227
  %1232 = vst [vmem:[%s9 + $0x10] sm:$0xff] %v1228
  %1233 = vst [vmem:[%s9 + $0x18] sm:$0xff] %v1229
  // Predicated region
  $region38: #{forward.1} parent=0 // pred_check
    _
  $region39: #{forward.1} parent=0 // pred_check_branch
    %1235 = sbr.rel (0) target = $region41
  $region40: #{forward.1} parent=0 // pred_region
    _
  $region41: #{forward.1} parent=0 // pred_fallthru
    _
  // Predicated region
  $region42: #{forward.1} parent=0 // pred_check
    _
  $region43: #{forward.1} parent=0 // pred_check_branch
    %1237 = sbr.rel (0) target = $region45
  $region44: #{forward.1} parent=0 // pred_region
    _
  $region45: #{forward.1} parent=0 // pred_fallthru
    _

</llo_original>
